<compile_context>
chip_gen: v7x
topology: tpu7x:2x2x1
jax: 0.10.0
libtpu: 0.0.40
codegen_flags: <defaults>
</compile_context>

<pallas_src>
import functools

import jax
import jax.numpy as jnp
from jax import lax
from jax.experimental import pallas as pl
from jax.experimental.pallas import tpu as pltpu

EPS = 1e-5


def _round_up(x, m):
    return ((x + m - 1) // m) * m


def _prenorm_linear_kernel(x_ref, gamma_ref, beta_ref, w_ref, b_ref, o_ref, *,
                           d_valid, d_pad):
    # x_ref: (tile_rows, D_pad) block of the flattened (rows, D_pad) input.
    x = x_ref[...].astype(jnp.float32)

    # LayerNorm statistics in f32 (biased variance, eps inside rsqrt =
    # torch.nn.LayerNorm).  If the feature dim was padded to a lane multiple,
    # mask the padded lanes out of the statistics.
    if d_valid == d_pad:
        mean = jnp.mean(x, axis=-1, keepdims=True)
        centered = x - mean
        var = jnp.mean(centered * centered, axis=-1, keepdims=True)
    else:
        lane = lax.broadcasted_iota(jnp.int32, x.shape, dimension=1)
        mask = (lane < d_valid).astype(jnp.float32)
        inv_d = jnp.float32(1.0 / d_valid)
        mean = jnp.sum(x * mask, axis=-1, keepdims=True) * inv_d
        centered = (x - mean) * mask
        var = jnp.sum(centered * centered, axis=-1, keepdims=True) * inv_d

    x_norm = centered * lax.rsqrt(var + EPS)
    y = (x_norm * gamma_ref[...].astype(jnp.float32)
         + beta_ref[...].astype(jnp.float32))

    # fn(norm(x)) = Linear: feed the MXU in the weight's native dtype
    # (bf16 in production), accumulate in f32.
    y = y.astype(w_ref.dtype)
    out = jnp.dot(y, w_ref[...], preferred_element_type=jnp.float32)
    out = out + b_ref[...].astype(jnp.float32)
    o_ref[...] = out.astype(o_ref.dtype)


def prenorm(x, gamma, beta, w, b, *, tile_rows=256, tile_n=512):
    """x: (B, S, D) -> (B, S, D_out).  gamma/beta: (D,), w: (D, D_out), b: (D_out,)."""
    B, S, D = x.shape
    D_out = w.shape[1]
    rows = B * S

    x_itemsize = jnp.dtype(x.dtype).itemsize
    w_itemsize = jnp.dtype(w.dtype).itemsize

    # Sublane packing multiple: 8 for 32-bit, 16 for 16-bit, 32 for 8-bit.
    sub = max(8, 32 // max(x_itemsize, 1))

    # Lane-dense feature dims.
    D_pad = _round_up(D, 128)
    D_out_pad = _round_up(D_out, 128)

    # Output-column tile (weight slab (D_pad, tn) is what sits in VMEM).
    tn = min(tile_n, D_out_pad)
    if D_out_pad % tn:
        tn = D_out_pad

    # Row tile: large, but no bigger than the (padded) row count.
    tr = _round_up(min(tile_rows, _round_up(rows, sub)), sub)
    rows_pad = _round_up(rows, tr)

    # Pad operands (zeros in padded lanes/rows keep the math exact; padded
    # output rows/columns are sliced away below).
    x2 = x.reshape(rows, D)
    if rows_pad != rows or D_pad != D:
        x2 = jnp.pad(x2, ((0, rows_pad - rows), (0, D_pad - D)))
    gamma2 = jnp.pad(gamma, (0, D_pad - D)).reshape(1, D_pad)
    beta2 = jnp.pad(beta, (0, D_pad - D)).reshape(1, D_pad)
    w2 = jnp.pad(w, ((0, D_pad - D), (0, D_out_pad - D_out)))
    b2 = jnp.pad(b, (0, D_out_pad - D_out)).reshape(1, D_out_pad)

    grid = (rows_pad // tr, D_out_pad // tn)

    kernel = functools.partial(_prenorm_linear_kernel, d_valid=D, d_pad=D_pad)

    # VMEM budget: double-buffered x/out tiles + weight slab + small params.
    vmem_bytes = (2 * tr * D_pad * x_itemsize
                  + 2 * tr * tn * x_itemsize
                  + 2 * D_pad * tn * w_itemsize
                  + 8 * (D_pad + tn) * 4)
    vmem_limit = int(min(max(2 * vmem_bytes, 32 * 1024 * 1024),
                         64 * 1024 * 1024))

    cost = pl.CostEstimate(
        flops=2 * rows * D * D_out,
        transcendentals=0,
        bytes_accessed=(rows * D * x_itemsize
                        + rows * D_out * x_itemsize
                        + D * D_out * w_itemsize))

    out2 = pl.pallas_call(
        kernel,
        out_shape=jax.ShapeDtypeStruct((rows_pad, D_out_pad), x.dtype),
        grid_spec=pltpu.PrefetchScalarGridSpec(
            num_scalar_prefetch=0,
            grid=grid,
            in_specs=[
                pl.BlockSpec((tr, D_pad), lambda i, j: (i, 0)),    # x row tile
                pl.BlockSpec((1, D_pad), lambda i, j: (0, 0)),     # gamma (resident)
                pl.BlockSpec((1, D_pad), lambda i, j: (0, 0)),     # beta  (resident)
                pl.BlockSpec((D_pad, tn), lambda i, j: (0, j)),    # weight column slab
                pl.BlockSpec((1, tn), lambda i, j: (0, j)),        # bias slab
            ],
            out_specs=pl.BlockSpec((tr, tn), lambda i, j: (i, j)),
        ),
        compiler_params=pltpu.CompilerParams(
            dimension_semantics=("parallel", "parallel"),
            vmem_limit_bytes=vmem_limit),
        cost_estimate=cost,
    )(x2, gamma2, beta2, w2, b2)

    return out2[:rows, :D_out].reshape(B, S, D_out)


def prenorm_reference(x, gamma, beta, w, b):
    xf = x.astype(jnp.float32)
    mean = jnp.mean(xf, axis=-1, keepdims=True)
    var = jnp.mean((xf - mean) ** 2, axis=-1, keepdims=True)
    xn = (xf - mean) * lax.rsqrt(var + EPS)
    y = xn * gamma.astype(jnp.float32) + beta.astype(jnp.float32)
    out = y @ w.astype(jnp.float32) + b.astype(jnp.float32)
    return out.astype(x.dtype)


if __name__ == "__main__":
    B, S, D = 2, 8, 32  # batch, seq, dim (small demo shapes)

    key = jax.random.PRNGKey(0)
    kx, kw, kb = jax.random.split(key, 3)

    x = jax.random.normal(kx, (B, S, D), dtype=jnp.float32)

    # LayerNorm params: PyTorch default init (weight=1, bias=0).
    gamma = jnp.ones((D,), dtype=jnp.float32)
    beta = jnp.zeros((D,), dtype=jnp.float32)

    # fn = Linear(D, D) with deterministic synthetic weights.
    bound = 1.0 / (D ** 0.5)
    w = jax.random.uniform(kw, (D, D), minval=-bound, maxval=bound, dtype=jnp.float32)
    b = jax.random.uniform(kb, (D,), minval=-bound, maxval=bound, dtype=jnp.float32)

    out = prenorm(x, gamma, beta, w, b)
    out = jax.block_until_ready(out)

    ref = prenorm_reference(x, gamma, beta, w, b)
    D_out = w.shape[1]
    assert out.shape == (B, S, D_out)
    assert jnp.allclose(out, ref, atol=1e-4, rtol=1e-4), "mismatch vs reference"

    print("KERNEL_OK")
</pallas_src>

<mosaic_0001>
module attributes {stable_mosaic.version = 11 : i64} {
  func.func @_prenorm_linear_kernel(%arg0: i32, %arg1: i32, %arg2: memref<16x128xf32, #tpu.memory_space<vmem>>, %arg3: memref<1x128xf32, #tpu.memory_space<vmem>>, %arg4: memref<1x128xf32, #tpu.memory_space<vmem>>, %arg5: memref<128x128xf32, #tpu.memory_space<vmem>>, %arg6: memref<1x128xf32, #tpu.memory_space<vmem>>, %arg7: memref<16x128xf32, #tpu.memory_space<vmem>>) attributes {dimension_semantics = [#tpu.dimension_semantics<parallel>, #tpu.dimension_semantics<parallel>], iteration_bounds = array<i64: 1, 1>, scalar_prefetch = 0 : i64, scratch_operands = 0 : i64, tpu.core_type = #tpu.core_type<tc>, window_params = [{transform_indices = @transform_0, window_bounds = array<i64: 16, 128>}, {pipeline_mode = #tpu.pipeline_mode<synchronous>, transform_indices = @transform_1, window_bounds = array<i64: 1, 128>}, {pipeline_mode = #tpu.pipeline_mode<synchronous>, transform_indices = @transform_2, window_bounds = array<i64: 1, 128>}, {transform_indices = @transform_3, window_bounds = array<i64: 128, 128>}, {transform_indices = @transform_4, window_bounds = array<i64: 1, 128>}, {transform_indices = @transform_5, window_bounds = array<i64: 16, 128>}]} {
    %c0 = arith.constant 0 : index
    %c0_0 = arith.constant 0 : index
    %0 = vector.load %arg2[%c0, %c0_0] : memref<16x128xf32, #tpu.memory_space<vmem>>, vector<16x128xf32>
    %1 = tpu.iota {dimensions = array<i32: 1>} : vector<16x128xi32>
    %c32_i32 = arith.constant 32 : i32
    %2 = vector.broadcast %c32_i32 : i32 to vector<16x128xi32>
    %3 = arith.cmpi slt, %1, %2 : vector<16x128xi32>
    %4 = arith.extui %3 : vector<16x128xi1> to vector<16x128xi32>
    %5 = arith.sitofp %4 : vector<16x128xi32> to vector<16x128xf32>
    %6 = arith.mulf %0, %5 : vector<16x128xf32>
    %cst = arith.constant dense<0.000000e+00> : vector<16xf32>
    %7 = vector.multi_reduction <add>, %6, %cst [1] : vector<16x128xf32> to vector<16xf32>
    %8 = vector.shape_cast %7 : vector<16xf32> to vector<16x1xf32>
    %cst_1 = arith.constant 3.125000e-02 : f32
    %9 = vector.broadcast %cst_1 : f32 to vector<16x1xf32>
    %10 = arith.mulf %8, %9 : vector<16x1xf32>
    %11 = vector.broadcast %10 : vector<16x1xf32> to vector<16x128xf32>
    %12 = arith.subf %0, %11 : vector<16x128xf32>
    %13 = arith.mulf %12, %5 : vector<16x128xf32>
    %14 = arith.mulf %13, %13 : vector<16x128xf32>
    %cst_2 = arith.constant dense<0.000000e+00> : vector<16xf32>
    %15 = vector.multi_reduction <add>, %14, %cst_2 [1] : vector<16x128xf32> to vector<16xf32>
    %16 = vector.shape_cast %15 : vector<16xf32> to vector<16x1xf32>
    %cst_3 = arith.constant 3.125000e-02 : f32
    %17 = vector.broadcast %cst_3 : f32 to vector<16x1xf32>
    %18 = arith.mulf %16, %17 : vector<16x1xf32>
    %cst_4 = arith.constant 9.99999974E-6 : f32
    %19 = vector.broadcast %cst_4 : f32 to vector<16x1xf32>
    %20 = arith.addf %18, %19 : vector<16x1xf32>
    %21 = math.rsqrt %20 : vector<16x1xf32>
    %22 = vector.broadcast %21 : vector<16x1xf32> to vector<16x128xf32>
    %23 = arith.mulf %13, %22 : vector<16x128xf32>
    %c0_5 = arith.constant 0 : index
    %c0_6 = arith.constant 0 : index
    %24 = vector.load %arg3[%c0_5, %c0_6] : memref<1x128xf32, #tpu.memory_space<vmem>>, vector<1x128xf32>
    %25 = vector.broadcast %24 : vector<1x128xf32> to vector<16x128xf32>
    %26 = arith.mulf %23, %25 : vector<16x128xf32>
    %c0_7 = arith.constant 0 : index
    %c0_8 = arith.constant 0 : index
    %27 = vector.load %arg4[%c0_7, %c0_8] : memref<1x128xf32, #tpu.memory_space<vmem>>, vector<1x128xf32>
    %28 = vector.broadcast %27 : vector<1x128xf32> to vector<16x128xf32>
    %29 = arith.addf %26, %28 : vector<16x128xf32>
    %c0_9 = arith.constant 0 : index
    %c0_10 = arith.constant 0 : index
    %30 = vector.load %arg5[%c0_9, %c0_10] : memref<128x128xf32, #tpu.memory_space<vmem>>, vector<128x128xf32>
    %cst_11 = arith.constant dense<0.000000e+00> : vector<16x128xf32>
    %31 = tpu.matmul %29, %30, %cst_11 {dimension_numbers = #tpu.dot_dimension_numbers<[1], [0], [0], [1], [0, 0, 1, 1], [], []>} : vector<16x128xf32>, vector<128x128xf32>, vector<16x128xf32> -> vector<16x128xf32>
    %c0_12 = arith.constant 0 : index
    %c0_13 = arith.constant 0 : index
    %32 = vector.load %arg6[%c0_12, %c0_13] : memref<1x128xf32, #tpu.memory_space<vmem>>, vector<1x128xf32>
    %33 = vector.broadcast %32 : vector<1x128xf32> to vector<16x128xf32>
    %34 = arith.addf %31, %33 : vector<16x128xf32>
    %c0_14 = arith.constant 0 : index
    %c0_15 = arith.constant 0 : index
    %35 = vector.load %arg7[%c0_14, %c0_15] : memref<16x128xf32, #tpu.memory_space<vmem>>, vector<16x128xf32>
    tpu.vector_store %arg7[%c0_14, %c0_15], %34 {strides = array<i32>} : memref<16x128xf32, #tpu.memory_space<vmem>>, vector<16x128xf32>,
    return
  }
  func.func @transform_0(%arg0: i32, %arg1: i32) -> (i32, i32) {
    %c0_i32 = arith.constant 0 : i32
    %c0_i32_0 = arith.constant 0 : i32
    return %arg0, %c0_i32 : i32, i32
  }
  func.func @transform_1(%arg0: i32, %arg1: i32) -> (i32, i32) {
    %c0_i32 = arith.constant 0 : i32
    %c0_i32_0 = arith.constant 0 : i32
    %c0_i32_1 = arith.constant 0 : i32
    return %c0_i32, %c0_i32_0 : i32, i32
  }
  func.func @transform_2(%arg0: i32, %arg1: i32) -> (i32, i32) {
    %c0_i32 = arith.constant 0 : i32
    %c0_i32_0 = arith.constant 0 : i32
    %c0_i32_1 = arith.constant 0 : i32
    return %c0_i32, %c0_i32_0 : i32, i32
  }
  func.func @transform_3(%arg0: i32, %arg1: i32) -> (i32, i32) {
    %c0_i32 = arith.constant 0 : i32
    %c0_i32_0 = arith.constant 0 : i32
    return %c0_i32, %arg1 : i32, i32
  }
  func.func @transform_4(%arg0: i32, %arg1: i32) -> (i32, i32) {
    %c0_i32 = arith.constant 0 : i32
    %c0_i32_0 = arith.constant 0 : i32
    return %c0_i32, %arg1 : i32, i32
  }
  func.func @transform_5(%arg0: i32, %arg1: i32) -> (i32, i32) {
    %c0_i32 = arith.constant 0 : i32
    return %arg0, %arg1 : i32, i32
  }
}

</mosaic_0001>

<llo_original>
// kernel: tpu_custom_call.1
$region0: #{tpu_custom_call.1}
  #allocation0 [shape = 'u32[]', space=smem, size = 0x4, offset = 0x4, fixed_abs, tag = 'smem constant byte address 0x4 - core index']
  #allocation1 [shape = 'u32[144,128]{1,0:T(1,128)}', space=vmem, size = 0x12000, scoped, tag = 'internal scratch']
  %s0 = inlined_call_operand.hbm [shape: f32[16,128], index: 0, kind: input, shape index: {}]
  %s1 = inlined_call_operand.vmem [shape: f32[1,128], index: 1, kind: input, shape index: {}]
  %s2 = inlined_call_operand.vmem [shape: f32[1,128], index: 2, kind: input, shape index: {}]
  %s3 = inlined_call_operand.hbm [shape: f32[128,128], index: 3, kind: input, shape index: {}]
  %s4 = inlined_call_operand.vmem [shape: f32[1,128], index: 4, kind: input, shape index: {}]
  %s5 = inlined_call_operand.hbm [shape: f32[16,128], index: 5, kind: output, shape index: {}]
  %s6 = sld [smem:[#allocation0]]
  $region38: #{tpu_custom_call.1} parent=0
    _
  %s8 = ssub.s32 1, %s6
  %s9 = scalar_select 0, %s8, %s6
  $region1: #{tpu_custom_call.1} parent=0
    #allocation2 [shape = 'u8[8192]{0}', space=vmem, size = 0x2000, scoped, tag = 'input window, operand 0, single buffered']
    #allocation3 [shape = 's32[1]{0}', space=sflag, size = 0x4, scoped, tag = 'scoped memory for tpu_custom_call.1']
    #allocation4 [shape = 's32[1]{0}', space=sflag, size = 0x4, scoped, tag = 'scoped memory for tpu_custom_call.1']
    #allocation5 [shape = 'u8[65536]{0}', space=vmem, size = 0x10000, scoped, tag = 'input window, operand 3, single buffered']
    #allocation6 [shape = 's32[1]{0}', space=sflag, size = 0x4, scoped, tag = 'scoped memory for tpu_custom_call.1']
    #allocation7 [shape = 'u8[8192]{0}', space=vmem, size = 0x2000, scoped, tag = 'output window, operand 0, single buffered']
    %10 = vsyncpa [#allocation3], 0
    %11 = vsyncpa [#allocation6], 0
    %12 = vsyncpa [#allocation4], 0
    // Predicated region
    $region2: #{tpu_custom_call.1} parent=1 // pred_check
      _
    $region3: #{tpu_custom_call.1} parent=1 // pred_check_branch
      %14 = sbr.rel (0) target = $region5
    $region4: #{tpu_custom_call.1} parent=1 // pred_region
      %s16 = ssub.s32 256, 256
      %17 = vsyncadd [#allocation3], %s16
      %s18 = sshll.u32 [#allocation2], 4
      %s19 = int_to_ptr.vmem [resolvable:$true] %s18
      %24 = dma.hbm_to_vmem [thread:$0]  %s0, 256, %s19, [#allocation3], 128, 128, 8
    $region5: #{tpu_custom_call.1} parent=1 // pred_fallthru
      _
    // Predicated region
    $region6: #{tpu_custom_call.1} parent=1 // pred_check
      _
    $region7: #{tpu_custom_call.1} parent=1 // pred_check_branch
      %26 = sbr.rel (0) target = $region9
    $region8: #{tpu_custom_call.1} parent=1 // pred_region
      _
    $region9: #{tpu_custom_call.1} parent=1 // pred_fallthru
      _
    // Predicated region
    $region10: #{tpu_custom_call.1} parent=1 // pred_check
      _
    $region11: #{tpu_custom_call.1} parent=1 // pred_check_branch
      %28 = sbr.rel (0) target = $region13
    $region12: #{tpu_custom_call.1} parent=1 // pred_region
      _
    $region13: #{tpu_custom_call.1} parent=1 // pred_fallthru
      _
    // Predicated region
    $region14: #{tpu_custom_call.1} parent=1 // pred_check
      _
    $region15: #{tpu_custom_call.1} parent=1 // pred_check_branch
      %30 = sbr.rel (0) target = $region17
    $region16: #{tpu_custom_call.1} parent=1 // pred_region
      %s32 = ssub.s32 2048, 2048
      %33 = vsyncadd [#allocation6], %s32
      %s34 = sshll.u32 [#allocation5], 4
      %s35 = int_to_ptr.vmem [resolvable:$true] %s34
      %40 = dma.hbm_to_vmem [thread:$0]  %s3, 2048, %s35, [#allocation6], 128, 128, 8
    $region17: #{tpu_custom_call.1} parent=1 // pred_fallthru
      _
    // Predicated region
    $region18: #{tpu_custom_call.1} parent=1 // pred_check
      _
    $region19: #{tpu_custom_call.1} parent=1 // pred_check_branch
      %42 = sbr.rel (0) target = $region21
    $region20: #{tpu_custom_call.1} parent=1 // pred_region
      _
    $region21: #{tpu_custom_call.1} parent=1 // pred_fallthru
      _
    // Predicated region
    $region22: #{tpu_custom_call.1} parent=1 // pred_check
      _
    $region23: #{tpu_custom_call.1} parent=1 // pred_check_branch
      %44 = sbr.rel (0) target = $region25
    $region24: #{tpu_custom_call.1} parent=1 // pred_region
      %45 = dma.done [#allocation3], 256
    $region25: #{tpu_custom_call.1} parent=1 // pred_fallthru
      _
    // Predicated region
    $region26: #{tpu_custom_call.1} parent=1 // pred_check
      _
    $region27: #{tpu_custom_call.1} parent=1 // pred_check_branch
      %47 = sbr.rel (0) target = $region29
    $region28: #{tpu_custom_call.1} parent=1 // pred_region
      %48 = dma.done [#allocation6], 2048
    $region29: #{tpu_custom_call.1} parent=1 // pred_fallthru
      _
    %v49 = vld [vmem:[#allocation2] sm:$0xff]
    %v50 = vld [vmem:[#allocation2 + $0x8] sm:$0xff]
    %v51 = vlaneseq
    %v52 = vand.u32 %v51, 127
    %vm53 = vcmp.lt.s32.totalorder %v52, 32
    %v54 = vsel %vm53, 1, 0
    %v55 = vcvt.s32.f32 %v54
    %v56 = vmul.f32 %v49, %v55
    %v57 = vmul.f32 %v50, %v55
    %58 = vadd.xlane.f32.xlu0 %v56
    %v59 = vpop.xlane.xlu0 %58
    %60 = vadd.xlane.f32.xlu0 %v57
    %v61 = vpop.xlane.xlu0 %60
    %v62 = vmul.f32 %v59, 0.03125
    %v63 = vmul.f32 %v61, 0.03125
    %v64 = vsub.f32 %v49, %v62
    %v65 = vsub.f32 %v50, %v63
    %v66 = vmul.f32 %v64, %v55
    %v67 = vmul.f32 %v65, %v55
    %v68 = vmul.f32 %v66, %v66
    %v69 = vmul.f32 %v67, %v67
    %70 = vadd.xlane.f32.xlu0 %v68
    %v71 = vpop.xlane.xlu0 %70
    %72 = vadd.xlane.f32.xlu0 %v69
    %v73 = vpop.xlane.xlu0 %72
    %v74 = vmul.f32 %v71, 0.03125
    %v75 = vmul.f32 %v73, 0.03125
    %v76 = vadd.f32 %v74, 1e-05
    %v77 = vadd.f32 %v75, 1e-05
    %v78 = vrsqrt.pop %v76
    %v79 = vrsqrt.pop %v77
    %v80 = vmul.f32 %v66, %v78
    %v81 = vmul.f32 %v67, %v79
    %v82 = vld [vmem:[%s1] sm:$0x1]
    %v84 = vlaneseq
    %v85 = vshrl.u32 %v84, 7
    %v86 = vsub.s32 0, %v85
    %v87 = vrot.slane %v82, %v86
    %v89 = vmul.f32 %v80, %v87
    %v90 = vmul.f32 %v81, %v87
    %v91 = vld [vmem:[%s2] sm:$0x1]
    %v93 = vlaneseq
    %v94 = vshrl.u32 %v93, 7
    %v95 = vsub.s32 0, %v94
    %v96 = vrot.slane %v91, %v95
    %v98 = vadd.f32 %v89, %v96
    %v99 = vadd.f32 %v90, %v96
    %v100 = vld [vmem:[#allocation5] sm:$0xff]
    %v101 = vld [vmem:[#allocation5 + $0x8] sm:$0xff]
    %v102 = vld [vmem:[#allocation5 + $0x10] sm:$0xff]
    %v103 = vld [vmem:[#allocation5 + $0x18] sm:$0xff]
    %v104 = vld [vmem:[#allocation5 + $0x20] sm:$0xff]
    %v105 = vld [vmem:[#allocation5 + $0x28] sm:$0xff]
    %v106 = vld [vmem:[#allocation5 + $0x30] sm:$0xff]
    %v107 = vld [vmem:[#allocation5 + $0x38] sm:$0xff]
    %v108 = vld [vmem:[#allocation5 + $0x40] sm:$0xff]
    %v109 = vld [vmem:[#allocation5 + $0x48] sm:$0xff]
    %v110 = vld [vmem:[#allocation5 + $0x50] sm:$0xff]
    %v111 = vld [vmem:[#allocation5 + $0x58] sm:$0xff]
    %v112 = vld [vmem:[#allocation5 + $0x60] sm:$0xff]
    %v113 = vld [vmem:[#allocation5 + $0x68] sm:$0xff]
    %v114 = vld [vmem:[#allocation5 + $0x70] sm:$0xff]
    %v115 = vld [vmem:[#allocation5 + $0x78] sm:$0xff]
    %v116 = vld [vmem:[%s4] sm:$0x1]
    %v118 = vlaneseq
    %v119 = vshrl.u32 %v118, 7
    %v120 = vsub.s32 0, %v119
    %v121 = vrot.slane %v116, %v120
    %123 = vmatprep.subr.mxu0 0.0
    %124 = vmatpush1.msra.mxu0 %v100
    %125 = vmatprep.subr.mxu0 0.0
    %126 = vmatpush1.msra.mxu0 %v101
    %127 = vmatprep.subr.mxu0 0.0
    %128 = vmatpush1.msra.mxu0 %v102
    %129 = vmatprep.subr.mxu0 0.0
    %130 = vmatpush1.msra.mxu0 %v103
    %131 = vmatprep.subr.mxu0 0.0
    %132 = vmatpush1.msra.mxu0 %v104
    %133 = vmatprep.subr.mxu0 0.0
    %134 = vmatpush1.msra.mxu0 %v105
    %135 = vmatprep.subr.mxu0 0.0
    %136 = vmatpush1.msra.mxu0 %v106
    %137 = vmatprep.subr.mxu0 0.0
    %138 = vmatpush1.msra.mxu0 %v107
    %139 = vmatprep.subr.mxu0 0.0
    %140 = vmatpush1.msra.mxu0 %v108
    %141 = vmatprep.subr.mxu0 0.0
    %142 = vmatpush1.msra.mxu0 %v109
    %143 = vmatprep.subr.mxu0 0.0
    %144 = vmatpush1.msra.mxu0 %v110
    %145 = vmatprep.subr.mxu0 0.0
    %146 = vmatpush1.msra.mxu0 %v111
    %147 = vmatprep.subr.mxu0 0.0
    %148 = vmatpush1.msra.mxu0 %v112
    %149 = vmatprep.subr.mxu0 0.0
    %150 = vmatpush1.msra.mxu0 %v113
    %151 = vmatprep.subr.mxu0 0.0
    %152 = vmatpush1.msra.mxu0 %v114
    %153 = vmatprep.subr.mxu0 0.0
    %154 = vmatpush1.msra.mxu0 %v115
    %155 = vmatprep.subr.mxu0 0.0
    %156 = vmatpush1.msra.mxu0 0.0
    %157 = vmatprep.subr.mxu0 0.0
    %158 = vmatpush1.msra.mxu0 0.0
    %159 = vmatprep.subr.mxu0 0.0
    %160 = vmatpush1.msra.mxu0 0.0
    %161 = vmatprep.subr.mxu0 0.0
    %162 = vmatpush1.msra.mxu0 0.0
    %163 = vmatprep.subr.mxu0 0.0
    %164 = vmatpush1.msra.mxu0 0.0
    %165 = vmatprep.subr.mxu0 0.0
    %166 = vmatpush1.msra.mxu0 0.0
    %167 = vmatprep.subr.mxu0 0.0
    %168 = vmatpush1.msra.mxu0 0.0
    %169 = vmatprep.subr.mxu0 0.0
    %170 = vmatpush1.msra.mxu0 0.0
    %171 = vmatprep.subr.mxu0 0.0
    %172 = vmatpush1.msra.mxu0 0.0
    %173 = vmatprep.subr.mxu0 0.0
    %174 = vmatpush1.msra.mxu0 0.0
    %175 = vmatprep.subr.mxu0 0.0
    %176 = vmatpush1.msra.mxu0 0.0
    %177 = vmatprep.subr.mxu0 0.0
    %178 = vmatpush1.msra.mxu0 0.0
    %179 = vmatprep.subr.mxu0 0.0
    %180 = vmatpush1.msra.mxu0 0.0
    %181 = vmatprep.subr.mxu0 0.0
    %182 = vmatpush1.msra.mxu0 0.0
    %183 = vmatprep.subr.mxu0 0.0
    %184 = vmatpush1.msra.mxu0 0.0
    %185 = vmatprep.subr.mxu0 0.0
    %186 = vmatpush1.msra.mxu0 0.0
    %187 = vmatprep.mubr.f32.mxu0 0.0
    %188 = vmatmul.mubr.f32.gmra.mrb[0].mxu0 %v98
    %v189 = vpop.f32.mrb[0].mxu0
    %v190 = vadd.f32 %v121, %v189
    %v191 = vpop.f32.mrb[0].mxu0
    %192 = vmatprep.mubr.f32.mxu0 0.0
    %193 = vmatmul.mubr.f32.gmra.mrb[0].mxu0 %v99
    %v194 = vpop.f32.mrb[0].mxu0
    %v195 = vadd.f32 %v121, %v194
    %v196 = vpop.f32.mrb[0].mxu0
    %197 = vdwg.mxu0
    %198 = vst [vmem:[#allocation7] sm:$0xff] %v190
    %199 = vst [vmem:[#allocation7 + $0x8] sm:$0xff] %v195
    // Predicated region
    $region30: #{tpu_custom_call.1} parent=1 // pred_check
      _
    $region31: #{tpu_custom_call.1} parent=1 // pred_check_branch
      %201 = sbr.rel (0) target = $region33
    $region32: #{tpu_custom_call.1} parent=1 // pred_region
      %s203 = ssub.s32 256, 256
      %204 = vsyncadd [#allocation4], %s203
      %s205 = sshll.u32 [#allocation7], 4
      %s206 = int_to_ptr.vmem [resolvable:$true] %s205
      %211 = dma.vmem_to_hbm [thread:$0]  %s206, 256, %s5, [#allocation4], 128, 128, 8
    $region33: #{tpu_custom_call.1} parent=1 // pred_fallthru
      _
    // Predicated region
    $region34: #{tpu_custom_call.1} parent=1 // pred_check
      _
    $region35: #{tpu_custom_call.1} parent=1 // pred_check_branch
      %213 = sbr.rel (0) target = $region37
    $region36: #{tpu_custom_call.1} parent=1 // pred_region
      %214 = dma.done [#allocation4], 256
    $region37: #{tpu_custom_call.1} parent=1 // pred_fallthru
      _
    %215 = vsyncpa [#allocation3], 1
    %216 = vsyncpa [#allocation6], 1
    %217 = vsyncpa [#allocation4], 1

</llo_original>
